<compile_context>
chip_gen: v5e
topology: v5e:2x2
jax: 0.10.0
libtpu: 0.0.40
codegen_flags: <defaults>
</compile_context>

<pallas_src>
import functools
import math

import jax
import jax.numpy as jnp
from jax import lax
from jax.experimental import pallas as pl
from jax.experimental.pallas import tpu as pltpu


# --------------------------- VMEM budget (per-gen) -------------------------- #

def _compute_vmem_limit():
    try:
        info = pltpu.get_tpu_info()
        cap = int(getattr(info, "vmem_capacity_bytes", 0) or 0)
        if cap > 0:
            # 3/4 of physical: 48 MiB on v7x (64 MiB phys), 96 MiB on v5e/v6e.
            return min((cap * 3) // 4, 100 * 1024 * 1024)
    except Exception:
        pass
    return 48 * 1024 * 1024  # safe on every generation


_VMEM_LIMIT = _compute_vmem_limit()


# ------------------------------ tiling helper ------------------------------ #

def _pick_tile(dim, target, aligns=(256, 128, 8)):
    """Largest tile <= target that divides `dim`, preferring the coarsest
    alignment in `aligns` (256 for the 256-wide MXU, then finer fallbacks).
    If dim <= target, use the full dim (always legal)."""
    if dim <= target:
        return dim
    for align in aligns:
        best = None
        t = align
        while t <= target:
            if dim % t == 0:
                best = t
            t += align
        if best is not None:
            return best
    return dim


# ----------------------------- tiled GEMM kernel ---------------------------- #

def _linear_kernel(x_ref, w_ref, b_ref, o_ref, acc_ref, *, activation):
    """One (tm, tn) output tile; reduction over the k grid axis into f32 scratch."""
    @pl.when(pl.program_id(2) == 0)
    def _():
        acc_ref[...] = jnp.zeros_like(acc_ref)

    acc_ref[...] += jnp.dot(x_ref[...], w_ref[...],
                            preferred_element_type=jnp.float32)

    @pl.when(pl.program_id(2) == pl.num_programs(2) - 1)
    def _():
        y = acc_ref[...] + b_ref[...].astype(jnp.float32)
        if activation == "gelu":          # exact (erf) GELU, as in BERT
            y = 0.5 * y * (1.0 + lax.erf(y * jnp.float32(1.0 / math.sqrt(2.0))))
        elif activation == "tanh":        # BERT pooler activation
            y = jnp.tanh(y)
        o_ref[...] = y.astype(o_ref.dtype)


def linear(x, w, b, activation="none", out_dtype=jnp.bfloat16,
           tm_target=256, tn_target=512, tk_target=1536):
    """y = act(x @ w + b); x:[M,K] (bf16), w:[K,N] (bf16), b:[N] (f32).

    tk_target >= 768 so the K axis collapses to a single step for all H=768
    GEMMs (and to 1536 for the 3072-wide FFN down-projection)."""
    M, K = x.shape
    _, N = w.shape
    tm = _pick_tile(M, tm_target, aligns=(256, 16, 8))
    tn = _pick_tile(N, tn_target, aligns=(256, 128))
    tk = _pick_tile(K, tk_target, aligns=(256, 128))
    grid = (M // tm, N // tn, K // tk)
    return pl.pallas_call(
        functools.partial(_linear_kernel, activation=activation),
        out_shape=jax.ShapeDtypeStruct((M, N), out_dtype),
        grid=grid,
        in_specs=[
            pl.BlockSpec((tm, tk), lambda i, j, k: (i, k)),
            pl.BlockSpec((tk, tn), lambda i, j, k: (k, j)),
            pl.BlockSpec((1, tn), lambda i, j, k: (0, j)),
        ],
        out_specs=pl.BlockSpec((tm, tn), lambda i, j, k: (i, j)),
        scratch_shapes=[pltpu.VMEM((tm, tn), jnp.float32)],
        compiler_params=pltpu.CompilerParams(
            dimension_semantics=("parallel", "parallel", "arbitrary"),
            vmem_limit_bytes=_VMEM_LIMIT),
    )(x, w, b.reshape(1, N))


# ------------------------------- LayerNorm ---------------------------------- #

def _ln_math(x, g, b, eps):
    mu = jnp.mean(x, axis=-1, keepdims=True)
    var = jnp.mean(jnp.square(x - mu), axis=-1, keepdims=True)
    return (x - mu) * lax.rsqrt(var + eps) * g + b


def _layernorm_kernel(x_ref, g_ref, b_ref, o_ref, *, eps):
    x = x_ref[...].astype(jnp.float32)
    o_ref[...] = _ln_math(x, g_ref[...], b_ref[...], eps).astype(o_ref.dtype)


def _add_layernorm_kernel(x_ref, r_ref, g_ref, b_ref, o_ref, *, eps):
    # residual add fused into the LN kernel (no standalone XLA add / HBM pass)
    x = x_ref[...].astype(jnp.float32) + r_ref[...].astype(jnp.float32)
    o_ref[...] = _ln_math(x, g_ref[...], b_ref[...], eps).astype(o_ref.dtype)


def layernorm(x, gamma, beta, residual=None, eps=1e-12,
              out_dtype=jnp.bfloat16, tm_target=512):
    """LayerNorm over last axis; x:[M,H]; optional fused residual add."""
    M, H = x.shape
    tm = _pick_tile(M, tm_target, aligns=(256, 16, 8))
    grid = (M // tm,)
    row_spec = pl.BlockSpec((tm, H), lambda i: (i, 0))
    vec_spec = pl.BlockSpec((1, H), lambda i: (0, 0))
    cp = pltpu.CompilerParams(dimension_semantics=("parallel",),
                              vmem_limit_bytes=_VMEM_LIMIT)
    if residual is None:
        return pl.pallas_call(
            functools.partial(_layernorm_kernel, eps=eps),
            out_shape=jax.ShapeDtypeStruct((M, H), out_dtype),
            grid=grid,
            in_specs=[row_spec, vec_spec, vec_spec],
            out_specs=row_spec,
            compiler_params=cp,
        )(x, gamma.reshape(1, H), beta.reshape(1, H))
    return pl.pallas_call(
        functools.partial(_add_layernorm_kernel, eps=eps),
        out_shape=jax.ShapeDtypeStruct((M, H), out_dtype),
        grid=grid,
        in_specs=[row_spec, row_spec, vec_spec, vec_spec],
        out_specs=row_spec,
        compiler_params=cp,
    )(x, residual, gamma.reshape(1, H), beta.reshape(1, H))


# ------------------------------- attention ---------------------------------- #

def _heads_per_step(n_heads, dh):
    """Smallest divisor g of n_heads with g*dh >= 128 (lane-dense blocks)."""
    g = n_heads
    for cand in range(1, n_heads + 1):
        if n_heads % cand == 0 and cand * dh >= 128:
            g = cand
            break
    return g


def _attention_kernel(q_ref, k_ref, v_ref, m_ref, o_ref, *, scale, g_heads, dh):
    """One (batch, head-group) step: bf16 QK^T (f32 acc) + masked softmax + P@V."""
    m = m_ref[0]                                   # [1, S] additive mask (f32)
    q_all = q_ref[0] * scale                       # [S, g*Dh] bf16 (scale folded here)
    k_all = k_ref[0]                               # [S, g*Dh] bf16
    v_all = v_ref[0]                               # [S, g*Dh] bf16
    outs = []
    for g in range(g_heads):                       # small static unroll (1-2 heads)
        lo, hi = g * dh, (g + 1) * dh
        q = q_all[:, lo:hi]
        k = k_all[:, lo:hi]
        v = v_all[:, lo:hi]
        # bf16 inputs, f32 accumulation, contraction on dim 1 of both (no k.T).
        s = lax.dot_general(q, k, dimension_numbers=(((1,), (1,)), ((), ())),
                            preferred_element_type=jnp.float32)        # [S, S]
        s = s + m
        s = s - jnp.max(s, axis=-1, keepdims=True)                     # stable softmax
        p = jnp.exp(s)
        p = p * pl.reciprocal(jnp.sum(p, axis=-1, keepdims=True), approx=True)
        ctx = jnp.dot(p.astype(v.dtype), v,
                      preferred_element_type=jnp.float32)              # [S, Dh]
        outs.append(ctx.astype(o_ref.dtype))
    o_ref[0] = outs[0] if g_heads == 1 else jnp.concatenate(outs, axis=-1)
    # TODO(synk): flash-style kv-tiled online-softmax path for long S (mandatory
    # at S>=1024 on v7x's 64 MiB VMEM); current path materializes [S,S] scores.


def fused_attention(qkv, add_mask, n_heads, out_dtype=jnp.bfloat16):
    """qkv: [B, S, 3H] (Q|K|V column blocks from the fused QKV GEMM);
    add_mask: [B, 1, S] additive (0 / -1e4).  Returns context [B, S, H]."""
    B, S, H3 = qkv.shape
    H = H3 // 3
    dh = H // n_heads
    g_heads = _heads_per_step(n_heads, dh)
    gd = g_heads * dh
    n_groups = n_heads // g_heads                  # H == n_groups * gd
    scale = 1.0 / math.sqrt(dh)
    q_spec = pl.BlockSpec((1, S, gd), lambda b, g: (b, 0, g))
    k_spec = pl.BlockSpec((1, S, gd), lambda b, g: (b, 0, n_groups + g))
    v_spec = pl.BlockSpec((1, S, gd), lambda b, g: (b, 0, 2 * n_groups + g))
    m_spec = pl.BlockSpec((1, 1, S), lambda b, g: (b, 0, 0))
    o_spec = pl.BlockSpec((1, S, gd), lambda b, g: (b, 0, g))
    return pl.pallas_call(
        functools.partial(_attention_kernel, scale=scale, g_heads=g_heads, dh=dh),
        out_shape=jax.ShapeDtypeStruct((B, S, H), out_dtype),
        grid=(B, n_groups),
        in_specs=[q_spec, k_spec, v_spec, m_spec],
        out_specs=o_spec,
        compiler_params=pltpu.CompilerParams(
            dimension_semantics=("parallel", "parallel"),
            vmem_limit_bytes=_VMEM_LIMIT),
    )(qkv, qkv, qkv, add_mask)


# --------------------- fused pooler + dropout + classifier ------------------ #

def _pooler_classifier_kernel(cls_ref, wp_ref, bp_ref, wc_ref, bc_ref, o_ref):
    pooled = jnp.tanh(
        jnp.dot(cls_ref[...], wp_ref[...], preferred_element_type=jnp.float32)
        + bp_ref[...])
    # nn.Dropout in eval mode is the identity.
    # TODO(synk): training-mode stochastic dropout (pltpu.prng_*) if needed.
    logits = (jnp.dot(pooled.astype(wc_ref.dtype), wc_ref[...],
                      preferred_element_type=jnp.float32)
              + bc_ref[...])
    o_ref[...] = logits


def pooler_classifier(cls_tok, wp, bp, wc, bc):
    """cls_tok:[B,H] bf16 -> tanh pooler -> classifier; wc/bc lane-padded to Np."""
    B, H = cls_tok.shape
    Np = wc.shape[1]
    full = lambda shape: pl.BlockSpec(shape, lambda i: tuple(0 for _ in shape))
    return pl.pallas_call(
        _pooler_classifier_kernel,
        out_shape=jax.ShapeDtypeStruct((B, Np), jnp.float32),
        grid=(1,),
        in_specs=[full((B, H)), full((H, H)), full((1, H)),
                  full((H, Np)), full((1, Np))],
        out_specs=full((B, Np)),
        compiler_params=pltpu.CompilerParams(
            dimension_semantics=("arbitrary",),
            vmem_limit_bytes=_VMEM_LIMIT),
    )(cls_tok, wp, bp.reshape(1, H), wc, bc.reshape(1, Np))


# --------------------------- parameter construction ------------------------ #

def init_params(key, cfg):
    ks = iter(jax.random.split(key, 128))

    def dense_p(fan_in, fan_out):
        w = (jax.random.normal(next(ks), (fan_in, fan_out), jnp.float32)
             * 0.02).astype(jnp.bfloat16)
        b = jnp.zeros((fan_out,), jnp.float32)
        return w, b

    H, I = cfg["hidden"], cfg["intermediate"]
    p = {
        "word_emb": jax.random.normal(next(ks), (cfg["vocab"], H), jnp.float32) * 0.02,
        "pos_emb": jax.random.normal(next(ks), (cfg["max_pos"], H), jnp.float32) * 0.02,
        "type_emb": jax.random.normal(next(ks), (2, H), jnp.float32) * 0.02,
        "emb_ln_g": jnp.ones((H,), jnp.float32),
        "emb_ln_b": jnp.zeros((H,), jnp.float32),
        "layers": [],
    }
    for _ in range(cfg["layers"]):
        layer = {
            "wqkv": dense_p(H, 3 * H),         # fused [Wq | Wk | Wv]
            "wo": dense_p(H, H),
            "attn_ln_g": jnp.ones((H,), jnp.float32),
            "attn_ln_b": jnp.zeros((H,), jnp.float32),
            "w1": dense_p(H, I), "w2": dense_p(I, H),
            "ffn_ln_g": jnp.ones((H,), jnp.float32),
            "ffn_ln_b": jnp.zeros((H,), jnp.float32),
        }
        p["layers"].append(layer)
    p["pooler"] = dense_p(H, H)
    p["classifier"] = dense_p(H, cfg["polarities"])
    return p


# --------------------------------- forward --------------------------------- #

def bert_spc_forward(params, text_bert_indices, attention_mask, cfg):
    B, S = text_bert_indices.shape
    H, nH, P = cfg["hidden"], cfg["heads"], cfg["polarities"]

    # ---- embeddings (gather = plain-JAX glue) + LayerNorm (kernel) ----
    word = jnp.take(params["word_emb"], text_bert_indices, axis=0)        # [B,S,H]
    pos = params["pos_emb"][:S][None, :, :]                               # [1,S,H]
    typ = params["type_emb"][0][None, None, :]                            # token_type_ids = 0
    emb = (word + pos + typ).astype(jnp.bfloat16).reshape(B * S, H)       # bf16 (halve LN read)
    h = layernorm(emb, params["emb_ln_g"], params["emb_ln_b"])            # bf16 [B*S,H]

    # additive attention mask: 0 for real tokens, -1e4 for padding
    add_mask = ((1.0 - attention_mask.astype(jnp.float32)) * -10000.0
                ).reshape(B, 1, S)

    for layer in params["layers"]:
        # fused QKV projection: one GEMM, one read of h
        qkv = linear(h, *layer["wqkv"])                                   # [B*S, 3H]
        # metadata-only reshape; Q/K/V column groups are sliced via BlockSpec
        # index_maps inside fused_attention (no XLA transposes).
        ctx = fused_attention(qkv.reshape(B, S, 3 * H), add_mask, nH)     # [B,S,H]
        ctx = ctx.reshape(B * S, H)                                       # metadata only
        attn_out = linear(ctx, *layer["wo"])
        h = layernorm(attn_out, layer["attn_ln_g"], layer["attn_ln_b"], residual=h)
        ffn = linear(h, *layer["w1"], activation="gelu")
        ffn_out = linear(ffn, *layer["w2"])
        h = layernorm(ffn_out, layer["ffn_ln_g"], layer["ffn_ln_b"], residual=h)

    # ---- BERT pooler: tanh(W_p @ h[:, 0]) == `[-1]` (pooler_output),
    #      then dropout (eval identity) + classifier, all in one tiny kernel ----
    cls = h.reshape(B, S, H)[:, 0, :]                                     # [B,H] bf16
    wp, bp = params["pooler"]
    wc, bc = params["classifier"]
    Np = ((P + 127) // 128) * 128                                         # lane-dense out
    if Np != P:
        wc = jnp.pad(wc, ((0, 0), (0, Np - P)))
        bc = jnp.pad(bc, ((0, Np - P),))
    logits = pooler_classifier(cls, wp, bp, wc, bc)[:, :P]                # [B, P]
    return logits


# ----------------------------------- main ----------------------------------- #

if __name__ == "__main__":
    # Small config consistent with the module (hidden divisible by 128 for
    # lane-dense blocks; head_dim=64 as in bert-base).
    cfg = dict(vocab=64, hidden=128, heads=2, layers=2, intermediate=256,
               max_pos=16, polarities=3)
    B, S = 2, 8

    key = jax.random.PRNGKey(0)
    k_par, k_ids = jax.random.split(key)
    params = init_params(k_par, cfg)

    text_bert_indices = jax.random.randint(k_ids, (B, S), 0, cfg["vocab"], jnp.int32)
    attention_mask = jnp.array([[1, 1, 1, 1, 1, 1, 0, 0],
                                [1, 1, 1, 1, 0, 0, 0, 0]], jnp.int32)

    logits = bert_spc_forward(params, text_bert_indices, attention_mask, cfg)
    logits = jax.block_until_ready(logits)
    assert logits.shape == (B, cfg["polarities"])
    assert bool(jnp.all(jnp.isfinite(logits)))
    print("KERNEL_OK")
</pallas_src>

<mosaic_0001>
module attributes {stable_mosaic.version = 11 : i64} {
  func.func @_layernorm_kernel(%arg0: i32, %arg1: memref<16x128xbf16, #tpu.memory_space<vmem>>, %arg2: memref<1x128xf32, #tpu.memory_space<vmem>>, %arg3: memref<1x128xf32, #tpu.memory_space<vmem>>, %arg4: memref<16x128xbf16, #tpu.memory_space<vmem>>) attributes {dimension_semantics = [#tpu.dimension_semantics<parallel>], iteration_bounds = array<i64: 1>, scalar_prefetch = 0 : i64, scratch_operands = 0 : i64, tpu.core_type = #tpu.core_type<tc>, window_params = [{transform_indices = @transform_0, window_bounds = array<i64: 16, 128>}, {pipeline_mode = #tpu.pipeline_mode<synchronous>, transform_indices = @transform_1, window_bounds = array<i64: 1, 128>}, {pipeline_mode = #tpu.pipeline_mode<synchronous>, transform_indices = @transform_2, window_bounds = array<i64: 1, 128>}, {transform_indices = @transform_3, window_bounds = array<i64: 16, 128>}]} {
    %c0 = arith.constant 0 : index
    %c0_0 = arith.constant 0 : index
    %0 = vector.load %arg1[%c0, %c0_0] : memref<16x128xbf16, #tpu.memory_space<vmem>>, vector<16x128xbf16>
    %1 = arith.extf %0 : vector<16x128xbf16> to vector<16x128xf32>
    %c0_1 = arith.constant 0 : index
    %c0_2 = arith.constant 0 : index
    %2 = vector.load %arg2[%c0_1, %c0_2] : memref<1x128xf32, #tpu.memory_space<vmem>>, vector<1x128xf32>
    %c0_3 = arith.constant 0 : index
    %c0_4 = arith.constant 0 : index
    %3 = vector.load %arg3[%c0_3, %c0_4] : memref<1x128xf32, #tpu.memory_space<vmem>>, vector<1x128xf32>
    %cst = arith.constant dense<0.000000e+00> : vector<16xf32>
    %4 = vector.multi_reduction <add>, %1, %cst [1] : vector<16x128xf32> to vector<16xf32>
    %5 = vector.shape_cast %4 : vector<16xf32> to vector<16x1xf32>
    %cst_5 = arith.constant 1.280000e+02 : f32
    %6 = vector.broadcast %cst_5 : f32 to vector<16x1xf32>
    %7 = arith.divf %5, %6 : vector<16x1xf32>
    %8 = vector.broadcast %7 : vector<16x1xf32> to vector<16x128xf32>
    %9 = arith.subf %1, %8 : vector<16x128xf32>
    %10 = arith.mulf %9, %9 : vector<16x128xf32>
    %cst_6 = arith.constant dense<0.000000e+00> : vector<16xf32>
    %11 = vector.multi_reduction <add>, %10, %cst_6 [1] : vector<16x128xf32> to vector<16xf32>
    %12 = vector.shape_cast %11 : vector<16xf32> to vector<16x1xf32>
    %cst_7 = arith.constant 1.280000e+02 : f32
    %13 = vector.broadcast %cst_7 : f32 to vector<16x1xf32>
    %14 = arith.divf %12, %13 : vector<16x1xf32>
    %15 = vector.broadcast %7 : vector<16x1xf32> to vector<16x128xf32>
    %16 = arith.subf %1, %15 : vector<16x128xf32>
    %cst_8 = arith.constant 9.99999996E-13 : f32
    %17 = vector.broadcast %cst_8 : f32 to vector<16x1xf32>
    %18 = arith.addf %14, %17 : vector<16x1xf32>
    %19 = math.rsqrt %18 : vector<16x1xf32>
    %20 = vector.broadcast %19 : vector<16x1xf32> to vector<16x128xf32>
    %21 = arith.mulf %16, %20 : vector<16x128xf32>
    %22 = vector.broadcast %2 : vector<1x128xf32> to vector<16x128xf32>
    %23 = arith.mulf %21, %22 : vector<16x128xf32>
    %24 = vector.broadcast %3 : vector<1x128xf32> to vector<16x128xf32>
    %25 = arith.addf %23, %24 : vector<16x128xf32>
    %26 = arith.truncf %25 : vector<16x128xf32> to vector<16x128xbf16>
    %c0_9 = arith.constant 0 : index
    %c0_10 = arith.constant 0 : index
    %27 = vector.load %arg4[%c0_9, %c0_10] : memref<16x128xbf16, #tpu.memory_space<vmem>>, vector<16x128xbf16>
    tpu.vector_store %arg4[%c0_9, %c0_10], %26 {strides = array<i32>} : memref<16x128xbf16, #tpu.memory_space<vmem>>, vector<16x128xbf16>,
    return
  }
  func.func @transform_0(%arg0: i32) -> (i32, i32) {
    %c0_i32 = arith.constant 0 : i32
    %c0_i32_0 = arith.constant 0 : i32
    return %arg0, %c0_i32 : i32, i32
  }
  func.func @transform_1(%arg0: i32) -> (i32, i32) {
    %c0_i32 = arith.constant 0 : i32
    %c0_i32_0 = arith.constant 0 : i32
    %c0_i32_1 = arith.constant 0 : i32
    return %c0_i32, %c0_i32_0 : i32, i32
  }
  func.func @transform_2(%arg0: i32) -> (i32, i32) {
    %c0_i32 = arith.constant 0 : i32
    %c0_i32_0 = arith.constant 0 : i32
    %c0_i32_1 = arith.constant 0 : i32
    return %c0_i32, %c0_i32_0 : i32, i32
  }
  func.func @transform_3(%arg0: i32) -> (i32, i32) {
    %c0_i32 = arith.constant 0 : i32
    %c0_i32_0 = arith.constant 0 : i32
    return %arg0, %c0_i32 : i32, i32
  }
}

</mosaic_0001>

<llo_original>
// kernel: tpu_custom_call.1
$region0: #{tpu_custom_call.1}
  #allocation0 [shape = 'u32[]', space=smem, size = 0x4, offset = 0x4, fixed_abs, tag = 'smem constant byte address 0x4 - core index']
  #allocation1 [shape = 'u32[72,128]{1,0:T(1,128)}', space=vmem, size = 0x9000, scoped, tag = 'internal scratch']
  %s0 = inlined_call_operand.hbm [shape: bf16[16,128], index: 0, kind: input, shape index: {}]
  %s1 = inlined_call_operand.hbm [shape: f32[1,128], index: 1, kind: input, shape index: {}]
  %s2 = inlined_call_operand.vmem [shape: f32[1,128], index: 2, kind: input, shape index: {}]
  %s3 = inlined_call_operand.hbm [shape: bf16[16,128], index: 3, kind: output, shape index: {}]
  %s4 = sld [smem:[#allocation0]]
  $region30: #{tpu_custom_call.1} parent=0
    _
  %s6 = ssub.s32 1, %s4
  %s7 = scalar_select 0, %s6, %s4
  $region1: #{tpu_custom_call.1} parent=0
    #allocation2 [shape = 'u8[4096]{0}', space=vmem, size = 0x1000, scoped, tag = 'input window, operand 0, single buffered']
    #allocation3 [shape = 's32[1]{0}', space=sflag, size = 0x4, scoped, tag = 'scoped memory for tpu_custom_call.1']
    #allocation4 [shape = 's32[1]{0}', space=sflag, size = 0x4, scoped, tag = 'scoped memory for tpu_custom_call.1']
    #allocation5 [shape = 'u8[512]{0}', space=vmem, size = 0x400, scoped, tag = 'input window, operand 1, single buffered']
    #allocation6 [shape = 's32[1]{0}', space=sflag, size = 0x4, scoped, tag = 'scoped memory for tpu_custom_call.1']
    #allocation7 [shape = 'u8[4096]{0}', space=vmem, size = 0x1000, scoped, tag = 'output window, operand 0, single buffered']
    %8 = vsyncpa [#allocation3], 0
    %9 = vsyncpa [#allocation6], 0
    %10 = vsyncpa [#allocation4], 0
    // Predicated region
    $region2: #{tpu_custom_call.1} parent=1 // pred_check
      _
    $region3: #{tpu_custom_call.1} parent=1 // pred_check_branch
      %12 = sbr.rel (0) target = $region5
    $region4: #{tpu_custom_call.1} parent=1 // pred_region
      %14 = vsyncadd [#allocation3], 0
      %s15 = sshll.u32 %s0, 4
      %s16 = int_to_ptr.hbm [resolvable:$true] %s15
      %s17 = sshll.u32 [#allocation2], 4
      %s18 = int_to_ptr.vmem [resolvable:$true] %s17
      %23 = dma.hbm_to_vmem [thread:$0]  %s16, 128, %s18, [#allocation3], 64, 64, 4
    $region5: #{tpu_custom_call.1} parent=1 // pred_fallthru
      _
    // Predicated region
    $region6: #{tpu_custom_call.1} parent=1 // pred_check
      _
    $region7: #{tpu_custom_call.1} parent=1 // pred_check_branch
      %25 = sbr.rel (0) target = $region9
    $region8: #{tpu_custom_call.1} parent=1 // pred_region
      %27 = vsyncadd [#allocation6], 0
      %s29 = sshll.u32 %s1, 4
      %s30 = int_to_ptr.hbm [resolvable:$true] %s29
      %s31 = sshll.u32 [#allocation5], 4
      %s32 = int_to_ptr.vmem [resolvable:$true] %s31
      %34 = dma.hbm_to_vmem [thread:$0]  %s30, 16, %s32, [#allocation6]
    $region9: #{tpu_custom_call.1} parent=1 // pred_fallthru
      _
    // Predicated region
    $region10: #{tpu_custom_call.1} parent=1 // pred_check
      _
    $region11: #{tpu_custom_call.1} parent=1 // pred_check_branch
      %36 = sbr.rel (0) target = $region13
    $region12: #{tpu_custom_call.1} parent=1 // pred_region
      _
    $region13: #{tpu_custom_call.1} parent=1 // pred_fallthru
      _
    // Predicated region
    $region14: #{tpu_custom_call.1} parent=1 // pred_check
      _
    $region15: #{tpu_custom_call.1} parent=1 // pred_check_branch
      %38 = sbr.rel (0) target = $region17
    $region16: #{tpu_custom_call.1} parent=1 // pred_region
      %40 = dma.done [#allocation3], 128
    $region17: #{tpu_custom_call.1} parent=1 // pred_fallthru
      _
    // Predicated region
    $region18: #{tpu_custom_call.1} parent=1 // pred_check
      _
    $region19: #{tpu_custom_call.1} parent=1 // pred_check_branch
      %42 = sbr.rel (0) target = $region21
    $region20: #{tpu_custom_call.1} parent=1 // pred_region
      %44 = dma.done [#allocation6], 16
    $region21: #{tpu_custom_call.1} parent=1 // pred_fallthru
      _
    %v45 = vld [vmem:[#allocation2] sm:$0xf]
    %v46 = vld [vmem:[#allocation2 + $0x4] sm:$0xf]
    %v47 = vunpack.c.l.bf16 %v45
    %v48 = vunpack.c.l.bf16 %v46
    %v49 = vld [vmem:[#allocation5] sm:$0x1]
    %v50 = vld [vmem:[%s2] sm:$0x1]
    %51 = vadd.xlane.f32.xlu0 %v47
    %v52 = vpop.xlane.xlu0 %51
    %53 = vadd.xlane.f32.xlu0 %v48
    %v54 = vpop.xlane.xlu0 %53
    %v55 = vrcp.pop 128.0
    %v56 = vmul.f32 128.0, %v55
    %v57 = vsub.f32 1.0, %v56
    %v58 = vmul.f32 %v55, %v57
    %v59 = vadd.f32 %v55, %v58
    %vm60 = vweird.f32 %v55
    %v61 = vsel %vm60, %v55, %v59
    %v62 = vmul.f32 %v52, %v61
    %v63 = vmul.f32 %v54, %v61
    %v64 = vsub.f32 %v47, %v62
    %v65 = vsub.f32 %v48, %v63
    %v66 = vmul.f32 %v64, %v64
    %v67 = vmul.f32 %v65, %v65
    %68 = vadd.xlane.f32.xlu0 %v66
    %v69 = vpop.xlane.xlu0 %68
    %70 = vadd.xlane.f32.xlu0 %v67
    %v71 = vpop.xlane.xlu0 %70
    %v72 = vmul.f32 %v69, %v61
    %v73 = vmul.f32 %v71, %v61
    %v74 = vadd.f32 %v72, 1e-12
    %v75 = vadd.f32 %v73, 1e-12
    %v76 = vrsqrt.pop %v74
    %v77 = vmul.f32 %v76, %v74
    %v78 = vmul.f32 %v77, %v76
    %v79 = vmul.f32 0.5, %v78
    %v80 = vsub.f32 1.5, %v79
    %v81 = vmul.f32 %v76, %v80
    %vm82 = vweird.f32 %v74
    %vm83 = vweird.f32 %v76
    %vm84 = vmor %vm82, %vm83
    %v85 = vsel %vm84, %v76, %v81
    %v86 = vrsqrt.pop %v75
    %v87 = vmul.f32 %v86, %v75
    %v88 = vmul.f32 %v87, %v86
    %v89 = vmul.f32 0.5, %v88
    %v90 = vsub.f32 1.5, %v89
    %v91 = vmul.f32 %v86, %v90
    %vm92 = vweird.f32 %v75
    %vm93 = vweird.f32 %v86
    %vm94 = vmor %vm92, %vm93
    %v95 = vsel %vm94, %v86, %v91
    %v96 = vmul.f32 %v64, %v85
    %v97 = vmul.f32 %v65, %v95
    %v99 = vperm.slane %v49, 0
    %v101 = vmul.f32 %v96, %v99
    %v102 = vmul.f32 %v97, %v99
    %v104 = vperm.slane %v50, 0
    %v106 = vadd.f32 %v101, %v104
    %v107 = vadd.f32 %v102, %v104
    %v108 = vpack.c.bf16 %v106, %v106
    %v109 = vpack.c.bf16 %v107, %v107
    %110 = vst [vmem:[#allocation7] sm:$0xf] %v108
    %111 = vst [vmem:[#allocation7 + $0x4] sm:$0xf] %v109
    // Predicated region
    $region22: #{tpu_custom_call.1} parent=1 // pred_check
      _
    $region23: #{tpu_custom_call.1} parent=1 // pred_check_branch
      %113 = sbr.rel (0) target = $region25
    $region24: #{tpu_custom_call.1} parent=1 // pred_region
      %115 = vsyncadd [#allocation4], 0
      %s116 = sshll.u32 [#allocation7], 4
      %s117 = int_to_ptr.vmem [resolvable:$true] %s116
      %s118 = sshll.u32 %s3, 4
      %s119 = int_to_ptr.hbm [resolvable:$true] %s118
      %124 = dma.vmem_to_hbm [thread:$0]  %s117, 128, %s119, [#allocation4], 64, 64, 4
    $region25: #{tpu_custom_call.1} parent=1 // pred_fallthru
      _
    // Predicated region
    $region26: #{tpu_custom_call.1} parent=1 // pred_check
      _
    $region27: #{tpu_custom_call.1} parent=1 // pred_check_branch
      %126 = sbr.rel (0) target = $region29
    $region28: #{tpu_custom_call.1} parent=1 // pred_region
      %128 = dma.done [#allocation4], 128
    $region29: #{tpu_custom_call.1} parent=1 // pred_fallthru
      _
    %129 = vsyncpa [#allocation3], 1
    %130 = vsyncpa [#allocation6], 1
    %131 = vsyncpa [#allocation4], 1

</llo_original>
